<compile_context>
chip_gen: v6e
topology: v6e:2x2x1
jax: 0.10.0
libtpu: 0.0.40
codegen_flags: <defaults>
</compile_context>

<pallas_src>
import math
from dataclasses import dataclass
from functools import partial
from typing import List

import numpy as np
import jax
import jax.numpy as jnp
from jax.experimental import pallas as pl
from jax.experimental.pallas import tpu as pltpu


# --------------------------------------------------------------------------
# Deterministic wav2vec2-base-960h character vocabulary (standard CTC vocab).
# --------------------------------------------------------------------------
WAV2VEC2_VOCAB = {
    "<pad>": 0, "<s>": 1, "</s>": 2, "<unk>": 3, "|": 4, "E": 5, "T": 6,
    "A": 7, "O": 8, "N": 9, "I": 10, "H": 11, "S": 12, "R": 13, "D": 14,
    "L": 15, "U": 16, "M": 17, "W": 18, "C": 19, "F": 20, "G": 21, "Y": 22,
    "P": 23, "B": 24, "V": 25, "K": 26, "'": 27, "X": 28, "J": 29, "Q": 30,
    "Z": 31,
}
BLANK_ID = WAV2VEC2_VOCAB["<pad>"]   # '[PAD]'/'<pad>' blank id (== 0)

V_PAD = 128          # vocab padded to a full lane width
N_PAD = 128          # token axis padded to a full lane width
NEG_LARGE = -1e30    # pad-logit bias: exp() underflows to exactly 0


def _round_up(x: int, m: int) -> int:
    return ((x + m - 1) // m) * m


@dataclass
class Point:
    token_index: int
    time_index: int
    score: float


@dataclass
class Segment:
    label: str
    start: int
    end: int
    duration: float
    score: float

    @property
    def length(self):
        return self.end - self.start


# --------------------------------------------------------------------------
# Kernel 1: fused CTC head -- one (D, 256) bf16 matmul, log_softmax stats over
# the vocab half, gathered-token half normalized and stored (only output).
# --------------------------------------------------------------------------
def _emission_kernel(h_ref, w_ref, b_ref, etok_ref):
    # In-kernel f32 -> bf16 cast (VPU): hidden is read once from HBM as f32.
    h = h_ref[...].astype(jnp.bfloat16)
    # bf16 MXU matmul, f32 accumulation.  lanes [0,128) = vocab logits
    # (pads biased to NEG_LARGE), lanes [128,256) = logits at [tokens..., blank].
    logits = jnp.dot(h, w_ref[...], preferred_element_type=jnp.float32) + b_ref[...]
    vocab = logits[:, :V_PAD]
    gathered = logits[:, V_PAD:]
    m = jnp.max(vocab, axis=-1, keepdims=True)
    lse = jnp.log(jnp.sum(jnp.exp(vocab - m), axis=-1, keepdims=True))
    # e_tok[t, j] = log_softmax(logits)[t, tokens[j]]; column N is the blank.
    etok_ref[...] = gathered - m - lse


def _ctc_head(hidden, w_head, b_head, tokens, blank_id):
    T, D = hidden.shape
    V = w_head.shape[1]
    N = len(tokens)
    if V > V_PAD:
        raise ValueError(f"vocab size {V} > {V_PAD} not supported")
    if N + 1 > N_PAD:
        # TODO(synk): extend the DP across multiple 128-lane blocks for N > 127.
        raise ValueError(f"transcript with {N} tokens > {N_PAD - 1} not supported")

    # Larger T tile (1024) amortizes per-grid-step pipeline overhead; still
    # ~10 MiB of VMEM at D=768 with double buffering.
    tile_t = 1024 if T >= 1024 else T
    t_pad = _round_up(T, tile_t)

    h = jnp.asarray(hidden, jnp.float32)
    if t_pad != T:
        h = jnp.pad(h, ((0, t_pad - T), (0, 0)))

    w32 = jnp.asarray(w_head, jnp.float32)
    b32 = jnp.asarray(b_head, jnp.float32)
    gather_cols = np.asarray(tuple(tokens) + (blank_id,), np.int64)  # static

    w_vocab = jnp.zeros((D, V_PAD), jnp.float32).at[:, :V].set(w32)
    w_gather = jnp.zeros((D, N_PAD), jnp.float32).at[:, :N + 1].set(w32[:, gather_cols])
    w_fused = jnp.concatenate([w_vocab, w_gather], axis=1).astype(jnp.bfloat16)

    b_vocab = jnp.full((V_PAD,), NEG_LARGE, jnp.float32).at[:V].set(b32)
    b_gather = jnp.zeros((N_PAD,), jnp.float32).at[:N + 1].set(b32[gather_cols])
    b_fused = jnp.concatenate([b_vocab, b_gather])[None, :]

    grid = (t_pad // tile_t,)
    e_tok_pad = pl.pallas_call(
        _emission_kernel,
        out_shape=jax.ShapeDtypeStruct((t_pad, N_PAD), jnp.float32),
        grid=grid,
        in_specs=[
            pl.BlockSpec((tile_t, D), lambda i: (i, 0)),       # hidden tile (f32)
            pl.BlockSpec((D, 2 * V_PAD), lambda i: (0, 0)),    # fused W, resident
            pl.BlockSpec((1, 2 * V_PAD), lambda i: (0, 0)),    # fused bias, resident
        ],
        out_specs=pl.BlockSpec((tile_t, N_PAD), lambda i: (i, 0)),  # lane-dense
        compiler_params=pltpu.CompilerParams(
            dimension_semantics=("parallel",),                  # megacore split
            vmem_limit_bytes=32 * 1024 * 1024),
    )(h, w_fused, b_fused)
    return e_tok_pad


# --------------------------------------------------------------------------
# Kernel 2: trellis dynamic program (get_trellis), chunked over T.
# Output is SHIFTED: out[t] = trellis[t + 1]; row 0 is assembled on host.
# --------------------------------------------------------------------------
def _make_trellis_kernel(chunk):
    groups = chunk // 8

    def kernel(e_blank_ref, col0_ref, e_tok_ref, out_ref, prev_ref):
        c = pl.program_id(0)
        base = c * chunk
        lane = jax.lax.broadcasted_iota(jnp.int32, (1, N_PAD), 1)
        is_lane0 = lane == 0
        is_lane1 = lane == 1

        @pl.when(c == 0)
        def _():
            # trellis[0]: col0[0] in lane 0 (0.0, or +inf for the N==1 / N>T
            # edge cases), -inf elsewhere.
            prev_ref[...] = jnp.where(is_lane0, col0_ref[0], -jnp.inf).astype(jnp.float32)

        def group_body(g, row):
            r0 = pl.multiple_of(g * 8, 8)
            e8 = e_tok_ref[pl.ds(r0, 8), :]          # one aligned (8,128) load
            rows = []
            # Two frames per step: roll(row,1), roll(row,2), roll(e0,1) only
            # depend on `row`/`e0`, so the XLU rolls co-issue and one roll
            # latency is hidden per pair.  `inner` == roll(row1, 1) exactly,
            # so this is bit-identical to the sequential recurrence.
            for i in range(0, 8, 2):
                t = base + r0 + i                     # global frame index
                eb0 = e_blank_ref[t]                  # emission[t,   blank]
                eb1 = e_blank_ref[t + 1]              # emission[t+1, blank]
                c1 = col0_ref[t + 1]                  # trellis[t+1, 0]
                c2 = col0_ref[t + 2]                  # trellis[t+2, 0]
                e0 = e8[i:i + 1, :]                   # emission[t,   tokens]
                e1 = e8[i + 1:i + 2, :]               # emission[t+1, tokens]
                row_r1 = pltpu.roll(row, shift=1, axis=1)
                row_r2 = pltpu.roll(row, shift=2, axis=1)
                e0_r1 = pltpu.roll(e0, shift=1, axis=1)
                # row1 = trellis[t+1]
                row1 = jnp.where(is_lane0, c1,
                                 jnp.maximum(row + eb0, row_r1 + e0))
                # inner == roll(row1, 1), computed straight from `row`
                inner = jnp.where(is_lane1, c1,
                                  jnp.maximum(row_r1 + eb0, row_r2 + e0_r1))
                # row2 = trellis[t+2]
                row2 = jnp.where(is_lane0, c2,
                                 jnp.maximum(row1 + eb1, inner + e1))
                rows.append(row1)
                rows.append(row2)
                row = row2
            out_ref[pl.ds(r0, 8), :] = jnp.concatenate(rows, axis=0)  # one store
            return row

        final = jax.lax.fori_loop(0, groups, group_body, prev_ref[...])
        prev_ref[...] = final                          # carry to the next chunk

    return kernel


def _trellis_shifted(e_tok_pad, num_tokens, num_frames):
    T = num_frames
    N = num_tokens
    if T < 2:
        raise ValueError("need at least 2 frames for the trellis DP")
    frames = T - 1                                     # recurrence steps
    chunk = 256 if frames > 256 else _round_up(frames, 8)
    frames_pad = _round_up(frames, chunk)

    # Blank emissions come straight from e_tok column N (the full padded
    # emissions array no longer exists -- it was never written back to HBM).
    e_blank = e_tok_pad[:T, N]
    col0 = jnp.concatenate(
        [jnp.zeros((1,), jnp.float32), jnp.cumsum(e_blank[1:])])
    inf_start = (T - N + 1) if N > 1 else 0
    col0 = jnp.where(jnp.arange(T) >= inf_start, jnp.inf, col0)

    # TODO(synk): for very long audio, pass e_blank / col0 as per-chunk SMEM
    # blocks instead of whole arrays to avoid the next_pow2(4T) SMEM padding.
    smem_len = max(frames_pad, T) + 8
    e_blank_smem = jnp.zeros((smem_len,), jnp.float32).at[:T].set(e_blank)
    col0_smem = jnp.full((smem_len,), jnp.inf, jnp.float32).at[:T].set(col0)

    rows = e_tok_pad.shape[0]
    if rows < frames_pad:
        e_tok_in = jnp.pad(e_tok_pad, ((0, frames_pad - rows), (0, 0)))
    elif rows > frames_pad:
        e_tok_in = e_tok_pad[:frames_pad]
    else:
        e_tok_in = e_tok_pad

    # TODO(synk): on v7x, batch independent utterances over a leading
    # 'parallel' grid axis so the serial DP does not idle the second TC.
    shifted = pl.pallas_call(
        _make_trellis_kernel(chunk),
        out_shape=jax.ShapeDtypeStruct((frames_pad, N_PAD), jnp.float32),
        grid=(frames_pad // chunk,),
        in_specs=[
            pl.BlockSpec(memory_space=pltpu.MemorySpace.SMEM),   # e_blank
            pl.BlockSpec(memory_space=pltpu.MemorySpace.SMEM),   # col0
            pl.BlockSpec((chunk, N_PAD), lambda i: (i, 0)),      # e_tok chunk
        ],
        out_specs=pl.BlockSpec((chunk, N_PAD), lambda i: (i, 0)),
        scratch_shapes=[pltpu.VMEM((1, N_PAD), jnp.float32)],    # carried row
        compiler_params=pltpu.CompilerParams(
            dimension_semantics=("arbitrary",)),
    )(e_blank_smem, col0_smem, e_tok_in)
    return shifted


# --------------------------------------------------------------------------
# Single jitted device entry point (weights/prep fused, keyed on token tuple).
# --------------------------------------------------------------------------
@partial(jax.jit, static_argnames=("tokens", "blank_id"))
def _aligner_device(hidden, w_head, b_head, *, tokens, blank_id):
    T = hidden.shape[0]
    e_tok_pad = _ctc_head(hidden, w_head, b_head, tokens, blank_id)
    shifted = _trellis_shifted(e_tok_pad, len(tokens), T)
    return e_tok_pad, shifted


def align_tokens(hidden, w_head, b_head, tokens):
    tokens = tuple(int(t) for t in tokens)
    return _aligner_device(hidden, w_head, b_head, tokens=tokens, blank_id=BLANK_ID)


def assemble_trellis(shifted_np, num_frames, num_tokens):
    """Host-side: prepend trellis row 0 to the shifted kernel output."""
    T, N = num_frames, num_tokens
    tr = np.empty((T, N), np.float32)
    tr[0, :] = -np.inf
    tr[0, 0] = np.inf if (N == 1 or T - N + 1 <= 0) else 0.0
    tr[1:, :] = shifted_np[:T - 1, :N]
    return tr


# --------------------------------------------------------------------------
# Host-side pieces (exact translations of the torch module's Python loops).
# backtrack reads emission[t, tokens[j]] / emission[t, blank] from e_tok /
# e_blank, which are identical values to the original emissions gathers.
# --------------------------------------------------------------------------
def encode(transcript: str) -> List[int]:
    unk = WAV2VEC2_VOCAB["<unk>"]
    return [WAV2VEC2_VOCAB.get(c, unk) for c in transcript.upper()]


def backtrack(trellis, e_tok, e_blank) -> List[Point]:
    t, j = trellis.shape[0] - 1, trellis.shape[1] - 1
    path = [Point(j, t, float(math.exp(e_blank[t])))]
    while j > 0:
        assert t > 0
        p_stay = float(e_blank[t - 1])
        p_change = float(e_tok[t - 1, j])
        stayed = trellis[t - 1, j] + p_stay
        changed = trellis[t - 1, j - 1] + p_change
        t -= 1
        if changed > stayed:
            j -= 1
        prob = float(math.exp(p_change if changed > stayed else p_stay))
        path.append(Point(j, t, prob))
    while t > 0:
        prob = float(math.exp(e_blank[t - 1]))
        path.append(Point(j, t - 1, prob))
        t -= 1
    return path[::-1]


def merge_repeats(path: List[Point], transcript: str) -> List[Segment]:
    i1, i2 = 0, 0
    segments = []
    while i1 < len(path):
        while i2 < len(path) and path[i1].token_index == path[i2].token_index:
            i2 += 1
        score = sum(path[k].score for k in range(i1, i2)) / (i2 - i1)
        x0, x1 = path[i1].time_index, path[i2 - 1].time_index + 1
        duration = x1 - x0
        segments.append(Segment(transcript[path[i1].token_index], x0, x1, duration, score))
        i1 = i2
    return segments


def merge_words(segments: List[Segment], separator: str = "|") -> List[Segment]:
    words = []
    i1, i2 = 0, 0
    while i1 < len(segments):
        if i2 >= len(segments) or segments[i2].label == separator:
            if i1 != i2:
                segs = segments[i1:i2]
                word = "".join(seg.label for seg in segs)
                score = sum(seg.score * seg.length for seg in segs) / sum(seg.length for seg in segs)
                x0, x1 = segments[i1].start, segments[i2 - 1].end
                duration = x1 - x0
                words.append(Segment(word, x0, x1, duration, score))
            i1 = i2 + 1
            i2 = i1
        else:
            i2 += 1
    return words


# --------------------------------------------------------------------------
# Pure-numpy references (same math as the torch module) for verification.
# --------------------------------------------------------------------------
def _log_softmax_np(logits):
    m = logits.max(-1, keepdims=True)
    z = logits - m
    return z - np.log(np.exp(z).sum(-1, keepdims=True))


def _trellis_reference(e_tok, e_blank, num_tokens):
    T, N = e_tok.shape[0], num_tokens
    trellis = np.zeros((T, N), dtype=np.float32)
    trellis[1:, 0] = np.cumsum(e_blank[1:], 0)
    trellis[0, 1:] = -np.inf
    trellis[-N + 1:, 0] = np.inf
    for t in range(T - 1):
        trellis[t + 1, 1:] = np.maximum(
            trellis[t, 1:] + e_blank[t],
            trellis[t, :-1] + e_tok[t, 1:],
        )
    return trellis


# --------------------------------------------------------------------------
if __name__ == "__main__":
    key = jax.random.PRNGKey(0)
    T, D, V = 16, 32, len(WAV2VEC2_VOCAB)   # frames, hidden dim, vocab (= 32)

    k1, k2, k3 = jax.random.split(key, 3)
    # TODO(synk): the pretrained wav2vec2 CNN+transformer encoder (and audio /
    # torchaudio loading) cannot be reproduced in-script; deterministic
    # synthetic hidden features stand in for the encoder output.
    hidden = jax.random.normal(k1, (T, D), jnp.float32)
    w_head = jax.random.normal(k2, (D, V), jnp.float32) * 0.1
    b_head = jax.random.normal(k3, (V,), jnp.float32) * 0.1

    text = "HI YO"
    transcript = "|" + "|".join(text.split(" ")) + "|"   # "|HI|YO|"
    tokens = encode(transcript)                          # 7 char tokens
    N = len(tokens)

    # Pallas kernels: fused CTC head + gather, then chunked trellis DP.
    e_tok_pad, shifted = align_tokens(hidden, w_head, b_head, tokens)
    e_tok_pad = jax.block_until_ready(e_tok_pad)
    shifted = jax.block_until_ready(shifted)

    e_full = np.asarray(e_tok_pad)[:T]
    e_blank_np = e_full[:, N]           # blank column appended by kernel 1
    e_tok_np = e_full[:, :N]            # emission[:, tokens[j]]
    tr_np = assemble_trellis(np.asarray(shifted), T, N)

    # Check 1: emission head (bf16 matmul / f32 log_softmax), gathered values.
    h_bf = np.asarray(jnp.asarray(hidden).astype(jnp.bfloat16).astype(jnp.float32))
    w_bf = np.asarray(jnp.asarray(w_head).astype(jnp.bfloat16).astype(jnp.float32))
    ref_em = _log_softmax_np(h_bf @ w_bf + np.asarray(b_head, np.float32))
    ref_e_tok = ref_em[:, np.asarray(tokens)]
    ref_e_blank = ref_em[:, BLANK_ID]
    assert np.allclose(e_tok_np, ref_e_tok, rtol=5e-3, atol=5e-3)
    assert np.allclose(e_blank_np, ref_e_blank, rtol=5e-3, atol=5e-3)

    # Check 2: trellis DP (exact torch recurrence) on the kernel's own emissions.
    ref_tr = _trellis_reference(e_tok_np, e_blank_np, N)
    assert np.allclose(tr_np, ref_tr, rtol=1e-3, atol=1e-3)

    # Host-side backtrack + merges (exact torch semantics).
    path = backtrack(tr_np, e_tok_np, e_blank_np)
    segments = merge_repeats(path, transcript)
    words = merge_words(segments)
    assert len(words) >= 1

    print("KERNEL_OK")
</pallas_src>

<mosaic_0001>
module attributes {stable_mosaic.version = 11 : i64} {
  func.func @_emission_kernel(%arg0: i32, %arg1: memref<16x32xf32, #tpu.memory_space<vmem>>, %arg2: memref<32x256xbf16, #tpu.memory_space<vmem>>, %arg3: memref<1x256xf32, #tpu.memory_space<vmem>>, %arg4: memref<16x128xf32, #tpu.memory_space<vmem>>) attributes {dimension_semantics = [#tpu.dimension_semantics<parallel>], iteration_bounds = array<i64: 1>, scalar_prefetch = 0 : i64, scratch_operands = 0 : i64, tpu.core_type = #tpu.core_type<tc>, window_params = [{transform_indices = @transform_0, window_bounds = array<i64: 16, 32>}, {pipeline_mode = #tpu.pipeline_mode<synchronous>, transform_indices = @transform_1, window_bounds = array<i64: 32, 256>}, {pipeline_mode = #tpu.pipeline_mode<synchronous>, transform_indices = @transform_2, window_bounds = array<i64: 1, 256>}, {transform_indices = @transform_3, window_bounds = array<i64: 16, 128>}]} {
    %c0 = arith.constant 0 : index
    %c0_0 = arith.constant 0 : index
    %0 = vector.load %arg1[%c0, %c0_0] : memref<16x32xf32, #tpu.memory_space<vmem>>, vector<16x32xf32>
    %1 = arith.truncf %0 : vector<16x32xf32> to vector<16x32xbf16>
    %c0_1 = arith.constant 0 : index
    %c0_2 = arith.constant 0 : index
    %2 = vector.load %arg2[%c0_1, %c0_2] : memref<32x256xbf16, #tpu.memory_space<vmem>>, vector<32x256xbf16>
    %cst = arith.constant dense<0.000000e+00> : vector<16x256xf32>
    %3 = tpu.matmul %1, %2, %cst {dimension_numbers = #tpu.dot_dimension_numbers<[1], [0], [0], [1], [0, 0, 1, 1], [], []>} : vector<16x32xbf16>, vector<32x256xbf16>, vector<16x256xf32> -> vector<16x256xf32>
    %c0_3 = arith.constant 0 : index
    %c0_4 = arith.constant 0 : index
    %4 = vector.load %arg3[%c0_3, %c0_4] : memref<1x256xf32, #tpu.memory_space<vmem>>, vector<1x256xf32>
    %5 = vector.broadcast %4 : vector<1x256xf32> to vector<16x256xf32>
    %6 = arith.addf %3, %5 : vector<16x256xf32>
    %7 = vector.extract_strided_slice %6 {offsets = [0, 0], sizes = [16, 128], strides = [1, 1]} : vector<16x256xf32> to vector<16x128xf32>
    %8 = vector.extract_strided_slice %6 {offsets = [0, 128], sizes = [16, 128], strides = [1, 1]} : vector<16x256xf32> to vector<16x128xf32>
    %cst_5 = arith.constant dense<0xFF800000> : vector<16xf32>
    %9 = vector.multi_reduction <maximumf>, %7, %cst_5 [1] : vector<16x128xf32> to vector<16xf32>
    %10 = vector.shape_cast %9 : vector<16xf32> to vector<16x1xf32>
    %11 = vector.broadcast %10 : vector<16x1xf32> to vector<16x128xf32>
    %12 = arith.subf %7, %11 : vector<16x128xf32>
    %13 = math.exp %12 : vector<16x128xf32>
    %cst_6 = arith.constant dense<0.000000e+00> : vector<16xf32>
    %14 = vector.multi_reduction <add>, %13, %cst_6 [1] : vector<16x128xf32> to vector<16xf32>
    %15 = vector.shape_cast %14 : vector<16xf32> to vector<16x1xf32>
    %16 = math.log %15 : vector<16x1xf32>
    %17 = vector.broadcast %10 : vector<16x1xf32> to vector<16x128xf32>
    %18 = arith.subf %8, %17 : vector<16x128xf32>
    %19 = vector.broadcast %16 : vector<16x1xf32> to vector<16x128xf32>
    %20 = arith.subf %18, %19 : vector<16x128xf32>
    %c0_7 = arith.constant 0 : index
    %c0_8 = arith.constant 0 : index
    %21 = vector.load %arg4[%c0_7, %c0_8] : memref<16x128xf32, #tpu.memory_space<vmem>>, vector<16x128xf32>
    tpu.vector_store %arg4[%c0_7, %c0_8], %20 {strides = array<i32>} : memref<16x128xf32, #tpu.memory_space<vmem>>, vector<16x128xf32>,
    return
  }
  func.func @transform_0(%arg0: i32) -> (i32, i32) {
    %c0_i32 = arith.constant 0 : i32
    %c0_i32_0 = arith.constant 0 : i32
    return %arg0, %c0_i32 : i32, i32
  }
  func.func @transform_1(%arg0: i32) -> (i32, i32) {
    %c0_i32 = arith.constant 0 : i32
    %c0_i32_0 = arith.constant 0 : i32
    %c0_i32_1 = arith.constant 0 : i32
    return %c0_i32, %c0_i32_0 : i32, i32
  }
  func.func @transform_2(%arg0: i32) -> (i32, i32) {
    %c0_i32 = arith.constant 0 : i32
    %c0_i32_0 = arith.constant 0 : i32
    %c0_i32_1 = arith.constant 0 : i32
    return %c0_i32, %c0_i32_0 : i32, i32
  }
  func.func @transform_3(%arg0: i32) -> (i32, i32) {
    %c0_i32 = arith.constant 0 : i32
    %c0_i32_0 = arith.constant 0 : i32
    return %arg0, %c0_i32 : i32, i32
  }
}

module attributes {stable_mosaic.version = 11 : i64} {
  func.func @kernel(%arg0: i32, %arg1: memref<24xf32, #tpu.memory_space<smem>>, %arg2: memref<24xf32, #tpu.memory_space<smem>>, %arg3: memref<16x128xf32, #tpu.memory_space<vmem>>, %arg4: memref<16x128xf32, #tpu.memory_space<vmem>>, %arg5: memref<1x128xf32, #tpu.memory_space<vmem>>) attributes {dimension_semantics = [#tpu.dimension_semantics<arbitrary>], iteration_bounds = array<i64: 1>, scalar_prefetch = 0 : i64, scratch_operands = 1 : i64, tpu.core_type = #tpu.core_type<tc>, window_params = [{transform_indices = @transform_0, window_bounds = array<i64: 24>}, {transform_indices = @transform_1, window_bounds = array<i64: 24>}, {transform_indices = @transform_2, window_bounds = array<i64: 16, 128>}, {transform_indices = @transform_3, window_bounds = array<i64: 16, 128>}]} {
    %c16_i32 = arith.constant 16 : i32
    %0 = arith.muli %arg0, %c16_i32 : i32
    %1 = tpu.iota {dimensions = array<i32: 1>} : vector<1x128xi32>
    %c0_i32 = arith.constant 0 : i32
    %2 = vector.broadcast %c0_i32 : i32 to vector<1x128xi32>
    %3 = arith.cmpi eq, %1, %2 : vector<1x128xi32>
    %c1_i32 = arith.constant 1 : i32
    %4 = vector.broadcast %c1_i32 : i32 to vector<1x128xi32>
    %5 = arith.cmpi eq, %1, %4 : vector<1x128xi32>
    %c0_i32_0 = arith.constant 0 : i32
    %6 = arith.cmpi eq, %arg0, %c0_i32_0 : i32
    %7 = arith.extui %6 : i1 to i32
    %c0_i32_1 = arith.constant 0 : i32
    %8 = arith.cmpi ne, %7, %c0_i32_1 : i32
    scf.if %8 {
      %c0_8 = arith.constant 0 : index
      %13 = memref.load %arg2[%c0_8] : memref<24xf32, #tpu.memory_space<smem>>
      %cst = arith.constant 0xFF800000 : f32
      %14 = vector.broadcast %13 : f32 to vector<1x128xf32>
      %15 = vector.broadcast %cst : f32 to vector<1x128xf32>
      %16 = arith.select %3, %14, %15 : vector<1x128xi1>, vector<1x128xf32>
      %c0_9 = arith.constant 0 : index
      %c0_10 = arith.constant 0 : index
      %17 = vector.load %arg5[%c0_9, %c0_10] : memref<1x128xf32, #tpu.memory_space<vmem>>, vector<1x128xf32>
      tpu.vector_store %arg5[%c0_9, %c0_10], %16 {strides = array<i32>} : memref<1x128xf32, #tpu.memory_space<vmem>>, vector<1x128xf32>,
    } else {
    }
    %c0 = arith.constant 0 : index
    %c0_2 = arith.constant 0 : index
    %9 = vector.load %arg5[%c0, %c0_2] : memref<1x128xf32, #tpu.memory_space<vmem>>, vector<1x128xf32>
    %c0_i32_3 = arith.constant 0 : i32
    %c2_i32 = arith.constant 2 : i32
    %10 = arith.addi %c0_i32_3, %c2_i32 : i32
    %c1_i32_4 = arith.constant 1 : i32
    %11 = scf.for %arg6 = %c0_i32_3 to %10 step %c1_i32_4 iter_args(%arg7 = %9) -> (vector<1x128xf32>)  : i32 {
      %c8_i32 = arith.constant 8 : i32
      %13 = arith.muli %arg6, %c8_i32 : i32
      %14 = tpu.assume_multiple %13, 8 : i32
      %15 = arith.index_cast %14 : i32 to index
      %c0_8 = arith.constant 0 : index
      %16 = vector.load %arg3[%15, %c0_8] : memref<16x128xf32, #tpu.memory_space<vmem>>, vector<8x128xf32>
      %17 = arith.addi %0, %14 : i32
      %c0_i32_9 = arith.constant 0 : i32
      %18 = arith.addi %17, %c0_i32_9 : i32
      %19 = arith.index_cast %18 : i32 to index
      %20 = memref.load %arg1[%19] : memref<24xf32, #tpu.memory_space<smem>>
      %c1_i32_10 = arith.constant 1 : i32
      %21 = arith.addi %18, %c1_i32_10 : i32
      %22 = arith.index_cast %21 : i32 to index
      %23 = memref.load %arg1[%22] : memref<24xf32, #tpu.memory_space<smem>>
      %c1_i32_11 = arith.constant 1 : i32
      %24 = arith.addi %18, %c1_i32_11 : i32
      %25 = arith.index_cast %24 : i32 to index
      %26 = memref.load %arg2[%25] : memref<24xf32, #tpu.memory_space<smem>>
      %c2_i32_12 = arith.constant 2 : i32
      %27 = arith.addi %18, %c2_i32_12 : i32
      %28 = arith.index_cast %27 : i32 to index
      %29 = memref.load %arg2[%28] : memref<24xf32, #tpu.memory_space<smem>>
      %30 = vector.extract_strided_slice %16 {offsets = [0, 0], sizes = [1, 128], strides = [1, 1]} : vector<8x128xf32> to vector<1x128xf32>
      %31 = vector.extract_strided_slice %16 {offsets = [1, 0], sizes = [1, 128], strides = [1, 1]} : vector<8x128xf32> to vector<1x128xf32>
      %c1_i32_13 = arith.constant 1 : i32
      %32 = tpu.dynamic_rotate %arg7 by %c1_i32_13 dim 1 : vector<1x128xf32>, i32 -> vector<1x128xf32>
      %c2_i32_14 = arith.constant 2 : i32
      %33 = tpu.dynamic_rotate %arg7 by %c2_i32_14 dim 1 : vector<1x128xf32>, i32 -> vector<1x128xf32>
      %c1_i32_15 = arith.constant 1 : i32
      %34 = tpu.dynamic_rotate %30 by %c1_i32_15 dim 1 : vector<1x128xf32>, i32 -> vector<1x128xf32>
      %35 = vector.broadcast %20 : f32 to vector<1x128xf32>
      %36 = arith.addf %arg7, %35 : vector<1x128xf32>
      %37 = arith.addf %32, %30 : vector<1x128xf32>
      %38 = arith.maximumf %36, %37 : vector<1x128xf32>
      %39 = vector.broadcast %26 : f32 to vector<1x128xf32>
      %40 = arith.select %3, %39, %38 : vector<1x128xi1>, vector<1x128xf32>
      %41 = vector.broadcast %20 : f32 to vector<1x128xf32>
      %42 = arith.addf %32, %41 : vector<1x128xf32>
      %43 = arith.addf %33, %34 : vector<1x128xf32>
      %44 = arith.maximumf %42, %43 : vector<1x128xf32>
      %45 = vector.broadcast %26 : f32 to vector<1x128xf32>
      %46 = arith.select %5, %45, %44 : vector<1x128xi1>, vector<1x128xf32>
      %47 = vector.broadcast %23 : f32 to vector<1x128xf32>
      %48 = arith.addf %40, %47 : vector<1x128xf32>
      %49 = arith.addf %46, %31 : vector<1x128xf32>
      %50 = arith.maximumf %48, %49 : vector<1x128xf32>
      %51 = vector.broadcast %29 : f32 to vector<1x128xf32>
      %52 = arith.select %3, %51, %50 : vector<1x128xi1>, vector<1x128xf32>
      %53 = arith.addi %0, %14 : i32
      %c2_i32_16 = arith.constant 2 : i32
      %54 = arith.addi %53, %c2_i32_16 : i32
      %55 = arith.index_cast %54 : i32 to index
      %56 = memref.load %arg1[%55] : memref<24xf32, #tpu.memory_space<smem>>
      %c1_i32_17 = arith.constant 1 : i32
      %57 = arith.addi %54, %c1_i32_17 : i32
      %58 = arith.index_cast %57 : i32 to index
      %59 = memref.load %arg1[%58] : memref<24xf32, #tpu.memory_space<smem>>
      %c1_i32_18 = arith.constant 1 : i32
      %60 = arith.addi %54, %c1_i32_18 : i32
      %61 = arith.index_cast %60 : i32 to index
      %62 = memref.load %arg2[%61] : memref<24xf32, #tpu.memory_space<smem>>
      %c2_i32_19 = arith.constant 2 : i32
      %63 = arith.addi %54, %c2_i32_19 : i32
      %64 = arith.index_cast %63 : i32 to index
      %65 = memref.load %arg2[%64] : memref<24xf32, #tpu.memory_space<smem>>
      %66 = vector.extract_strided_slice %16 {offsets = [2, 0], sizes = [1, 128], strides = [1, 1]} : vector<8x128xf32> to vector<1x128xf32>
      %67 = vector.extract_strided_slice %16 {offsets = [3, 0], sizes = [1, 128], strides = [1, 1]} : vector<8x128xf32> to vector<1x128xf32>
      %c1_i32_20 = arith.constant 1 : i32
      %68 = tpu.dynamic_rotate %52 by %c1_i32_20 dim 1 : vector<1x128xf32>, i32 -> vector<1x128xf32>
      %c2_i32_21 = arith.constant 2 : i32
      %69 = tpu.dynamic_rotate %52 by %c2_i32_21 dim 1 : vector<1x128xf32>, i32 -> vector<1x128xf32>
      %c1_i32_22 = arith.constant 1 : i32
      %70 = tpu.dynamic_rotate %66 by %c1_i32_22 dim 1 : vector<1x128xf32>, i32 -> vector<1x128xf32>
      %71 = vector.broadcast %56 : f32 to vector<1x128xf32>
      %72 = arith.addf %52, %71 : vector<1x128xf32>
      %73 = arith.addf %68, %66 : vector<1x128xf32>
      %74 = arith.maximumf %72, %73 : vector<1x128xf32>
      %75 = vector.broadcast %62 : f32 to vector<1x128xf32>
      %76 = arith.select %3, %75, %74 : vector<1x128xi1>, vector<1x128xf32>
      %77 = vector.broadcast %56 : f32 to vector<1x128xf32>
      %78 = arith.addf %68, %77 : vector<1x128xf32>
      %79 = arith.addf %69, %70 : vector<1x128xf32>
      %80 = arith.maximumf %78, %79 : vector<1x128xf32>
      %81 = vector.broadcast %62 : f32 to vector<1x128xf32>
      %82 = arith.select %5, %81, %80 : vector<1x128xi1>, vector<1x128xf32>
      %83 = vector.broadcast %59 : f32 to vector<1x128xf32>
      %84 = arith.addf %76, %83 : vector<1x128xf32>
      %85 = arith.addf %82, %67 : vector<1x128xf32>
      %86 = arith.maximumf %84, %85 : vector<1x128xf32>
      %87 = vector.broadcast %65 : f32 to vector<1x128xf32>
      %88 = arith.select %3, %87, %86 : vector<1x128xi1>, vector<1x128xf32>
      %89 = arith.addi %0, %14 : i32
      %c4_i32 = arith.constant 4 : i32
      %90 = arith.addi %89, %c4_i32 : i32
      %91 = arith.index_cast %90 : i32 to index
      %92 = memref.load %arg1[%91] : memref<24xf32, #tpu.memory_space<smem>>
      %c1_i32_23 = arith.constant 1 : i32
      %93 = arith.addi %90, %c1_i32_23 : i32
      %94 = arith.index_cast %93 : i32 to index
      %95 = memref.load %arg1[%94] : memref<24xf32, #tpu.memory_space<smem>>
      %c1_i32_24 = arith.constant 1 : i32
      %96 = arith.addi %90, %c1_i32_24 : i32
      %97 = arith.index_cast %96 : i32 to index
      %98 = memref.load %arg2[%97] : memref<24xf32, #tpu.memory_space<smem>>
      %c2_i32_25 = arith.constant 2 : i32
      %99 = arith.addi %90, %c2_i32_25 : i32
      %100 = arith.index_cast %99 : i32 to index
      %101 = memref.load %arg2[%100] : memref<24xf32, #tpu.memory_space<smem>>
      %102 = vector.extract_strided_slice %16 {offsets = [4, 0], sizes = [1, 128], strides = [1, 1]} : vector<8x128xf32> to vector<1x128xf32>
      %103 = vector.extract_strided_slice %16 {offsets = [5, 0], sizes = [1, 128], strides = [1, 1]} : vector<8x128xf32> to vector<1x128xf32>
      %c1_i32_26 = arith.constant 1 : i32
      %104 = tpu.dynamic_rotate %88 by %c1_i32_26 dim 1 : vector<1x128xf32>, i32 -> vector<1x128xf32>
      %c2_i32_27 = arith.constant 2 : i32
      %105 = tpu.dynamic_rotate %88 by %c2_i32_27 dim 1 : vector<1x128xf32>, i32 -> vector<1x128xf32>
      %c1_i32_28 = arith.constant 1 : i32
      %106 = tpu.dynamic_rotate %102 by %c1_i32_28 dim 1 : vector<1x128xf32>, i32 -> vector<1x128xf32>
      %107 = vector.broadcast %92 : f32 to vector<1x128xf32>
      %108 = arith.addf %88, %107 : vector<1x128xf32>
      %109 = arith.addf %104, %102 : vector<1x128xf32>
      %110 = arith.maximumf %108, %109 : vector<1x128xf32>
      %111 = vector.broadcast %98 : f32 to vector<1x128xf32>
      %112 = arith.select %3, %111, %110 : vector<1x128xi1>, vector<1x128xf32>
      %113 = vector.broadcast %92 : f32 to vector<1x128xf32>
      %114 = arith.addf %104, %113 : vector<1x128xf32>
      %115 = arith.addf %105, %106 : vector<1x128xf32>
      %116 = arith.maximumf %114, %115 : vector<1x128xf32>
      %117 = vector.broadcast %98 : f32 to vector<1x128xf32>
      %118 = arith.select %5, %117, %116 : vector<1x128xi1>, vector<1x128xf32>
      %119 = vector.broadcast %95 : f32 to vector<1x128xf32>
      %120 = arith.addf %112, %119 : vector<1x128xf32>
      %121 = arith.addf %118, %103 : vector<1x128xf32>
      %122 = arith.maximumf %120, %121 : vector<1x128xf32>
      %123 = vector.broadcast %101 : f32 to vector<1x128xf32>
      %124 = arith.select %3, %123, %122 : vector<1x128xi1>, vector<1x128xf32>
      %125 = arith.addi %0, %14 : i32
      %c6_i32 = arith.constant 6 : i32
      %126 = arith.addi %125, %c6_i32 : i32
      %127 = arith.index_cast %126 : i32 to index
      %128 = memref.load %arg1[%127] : memref<24xf32, #tpu.memory_space<smem>>
      %c1_i32_29 = arith.constant 1 : i32
      %129 = arith.addi %126, %c1_i32_29 : i32
      %130 = arith.index_cast %129 : i32 to index
      %131 = memref.load %arg1[%130] : memref<24xf32, #tpu.memory_space<smem>>
      %c1_i32_30 = arith.constant 1 : i32
      %132 = arith.addi %126, %c1_i32_30 : i32
      %133 = arith.index_cast %132 : i32 to index
      %134 = memref.load %arg2[%133] : memref<24xf32, #tpu.memory_space<smem>>
      %c2_i32_31 = arith.constant 2 : i32
      %135 = arith.addi %126, %c2_i32_31 : i32
      %136 = arith.index_cast %135 : i32 to index
      %137 = memref.load %arg2[%136] : memref<24xf32, #tpu.memory_space<smem>>
      %138 = vector.extract_strided_slice %16 {offsets = [6, 0], sizes = [1, 128], strides = [1, 1]} : vector<8x128xf32> to vector<1x128xf32>
      %139 = vector.extract_strided_slice %16 {offsets = [7, 0], sizes = [1, 128], strides = [1, 1]} : vector<8x128xf32> to vector<1x128xf32>
      %c1_i32_32 = arith.constant 1 : i32
      %140 = tpu.dynamic_rotate %124 by %c1_i32_32 dim 1 : vector<1x128xf32>, i32 -> vector<1x128xf32>
      %c2_i32_33 = arith.constant 2 : i32
      %141 = tpu.dynamic_rotate %124 by %c2_i32_33 dim 1 : vector<1x128xf32>, i32 -> vector<1x128xf32>
      %c1_i32_34 = arith.constant 1 : i32
      %142 = tpu.dynamic_rotate %138 by %c1_i32_34 dim 1 : vector<1x128xf32>, i32 -> vector<1x128xf32>
      %143 = vector.broadcast %128 : f32 to vector<1x128xf32>
      %144 = arith.addf %124, %143 : vector<1x128xf32>
      %145 = arith.addf %140, %138 : vector<1x128xf32>
      %146 = arith.maximumf %144, %145 : vector<1x128xf32>
      %147 = vector.broadcast %134 : f32 to vector<1x128xf32>
      %148 = arith.select %3, %147, %146 : vector<1x128xi1>, vector<1x128xf32>
      %149 = vector.broadcast %128 : f32 to vector<1x128xf32>
      %150 = arith.addf %140, %149 : vector<1x128xf32>
      %151 = arith.addf %141, %142 : vector<1x128xf32>
      %152 = arith.maximumf %150, %151 : vector<1x128xf32>
      %153 = vector.broadcast %134 : f32 to vector<1x128xf32>
      %154 = arith.select %5, %153, %152 : vector<1x128xi1>, vector<1x128xf32>
      %155 = vector.broadcast %131 : f32 to vector<1x128xf32>
      %156 = arith.addf %148, %155 : vector<1x128xf32>
      %157 = arith.addf %154, %139 : vector<1x128xf32>
      %158 = arith.maximumf %156, %157 : vector<1x128xf32>
      %159 = vector.broadcast %137 : f32 to vector<1x128xf32>
      %160 = arith.select %3, %159, %158 : vector<1x128xi1>, vector<1x128xf32>
      %161 = tpu.concatenate %40, %52, %76, %88, %112, %124, %148, %160 in 0 : vector<1x128xf32>, vector<1x128xf32>, vector<1x128xf32>, vector<1x128xf32>, vector<1x128xf32>, vector<1x128xf32>, vector<1x128xf32>, vector<1x128xf32> -> vector<8x128xf32>
      %162 = arith.index_cast %14 : i32 to index
      %c0_35 = arith.constant 0 : index
      %163 = vector.load %arg4[%162, %c0_35] : memref<16x128xf32, #tpu.memory_space<vmem>>, vector<8x128xf32>
      tpu.vector_store %arg4[%162, %c0_35], %161 {strides = array<i32>} : memref<16x128xf32, #tpu.memory_space<vmem>>, vector<8x128xf32>,
      scf.yield %160 : vector<1x128xf32>
    }
    %c2_i32_5 = arith.constant 2 : i32
    %c0_6 = arith.constant 0 : index
    %c0_7 = arith.constant 0 : index
    %12 = vector.load %arg5[%c0_6, %c0_7] : memref<1x128xf32, #tpu.memory_space<vmem>>, vector<1x128xf32>
    tpu.vector_store %arg5[%c0_6, %c0_7], %11 {strides = array<i32>} : memref<1x128xf32, #tpu.memory_space<vmem>>, vector<1x128xf32>,
    return
  }
  func.func @transform_0(%arg0: i32) -> i32 {
    %c0_i32 = arith.constant 0 : i32
    %c0_i32_0 = arith.constant 0 : i32
    return %c0_i32 : i32
  }
  func.func @transform_1(%arg0: i32) -> i32 {
    %c0_i32 = arith.constant 0 : i32
    %c0_i32_0 = arith.constant 0 : i32
    return %c0_i32 : i32
  }
  func.func @transform_2(%arg0: i32) -> (i32, i32) {
    %c0_i32 = arith.constant 0 : i32
    %c0_i32_0 = arith.constant 0 : i32
    return %arg0, %c0_i32 : i32, i32
  }
  func.func @transform_3(%arg0: i32) -> (i32, i32) {
    %c0_i32 = arith.constant 0 : i32
    %c0_i32_0 = arith.constant 0 : i32
    return %arg0, %c0_i32 : i32, i32
  }
}

</mosaic_0001>

<llo_original>
// kernel: _aligner_device.2
$region0: #{_aligner_device.2}
  #allocation0 [shape = 'u32[]', space=smem, size = 0x4, offset = 0x4, fixed_abs, tag = 'smem constant byte address 0x4 - core index']
  #allocation1 [shape = 'u32[144,128]{1,0:T(1,128)}', space=vmem, size = 0x12000, scoped, tag = 'internal scratch']
  %s0 = inlined_call_operand.vmem [shape: f32[16,32], index: 0, kind: input, shape index: {}]
  %s1 = inlined_call_operand.vmem [shape: bf16[32,256], index: 1, kind: input, shape index: {}]
  %s2 = inlined_call_operand.vmem [shape: f32[1,256], index: 2, kind: input, shape index: {}]
  %s3 = inlined_call_operand.vmem [shape: f32[16,128], index: 3, kind: output, shape index: {}]
  %s4 = sld [smem:[#allocation0]]
  $region22: #{_aligner_device.2} parent=0
    _
  %s6 = ssub.s32 1, %s4
  %s7 = scalar_select 0, %s6, %s4
  // Predicated region
  $region2: #{_aligner_device.2} parent=0 // pred_check
    _
  $region3: #{_aligner_device.2} parent=0 // pred_check_branch
    %9 = sbr.rel (0) target = $region5
  $region4: #{_aligner_device.2} parent=0 // pred_region
    _
  $region5: #{_aligner_device.2} parent=0 // pred_fallthru
    _
  // Predicated region
  $region6: #{_aligner_device.2} parent=0 // pred_check
    _
  $region7: #{_aligner_device.2} parent=0 // pred_check_branch
    %11 = sbr.rel (0) target = $region9
  $region8: #{_aligner_device.2} parent=0 // pred_region
    _
  $region9: #{_aligner_device.2} parent=0 // pred_fallthru
    _
  // Predicated region
  $region10: #{_aligner_device.2} parent=0 // pred_check
    _
  $region11: #{_aligner_device.2} parent=0 // pred_check_branch
    %13 = sbr.rel (0) target = $region13
  $region12: #{_aligner_device.2} parent=0 // pred_region
    _
  $region13: #{_aligner_device.2} parent=0 // pred_fallthru
    _
  %v15 = vld [vmem:[%s0] sm:$0xff]
  %v16 = vld [vmem:[%s0 + $0x8] sm:$0xff]
  %v17 = vpack.c.bf16 %v16, %v15
  %v18 = vld [vmem:[%s1] sm:$0xff]
  %v19 = vld [vmem:[%s1 + $0x8] sm:$0xff]
  %v20 = vld [vmem:[%s1 + $0x10] sm:$0xff]
  %v21 = vld [vmem:[%s1 + $0x18] sm:$0xff]
  %v22 = vld [vmem:[%s2] sm:$0x3]
  %v24 = vlaneseq
  %v25 = vshrl.u32 %v24, 7
  %v26 = vsub.s32 0, %v25
  %v27 = vrot.slane %v22, %v26
  %v28 = vlaneseq
  %v29 = vshrl.u32 %v28, 7
  %v30 = vsub.s32 1, %v29
  %v31 = vrot.slane %v22, %v30
  %v38 = vunpack.c.l.b16 %v18
  %v39 = vunpack.c.h.b16 %v18
  %v40 = vunpack.c.l.b16 %v19
  %v41 = vunpack.c.h.b16 %v19
  %v42 = vunpack.c.l.b16 %v20
  %v43 = vunpack.c.h.b16 %v20
  %v44 = vunpack.c.l.b16 %v21
  %v45 = vunpack.c.h.b16 %v21
  %v46 = vpack.c.b16 %v40, %v38
  %v47 = vpack.c.b16 %v41, %v39
  %v48 = vpack.c.b16 %v44, %v42
  %v49 = vpack.c.b16 %v45, %v43
  %vm54 = vcmask 261120
  %v56 = vsel %vm54, %v17, 0
  %58 = vmatprep.subr.bf16.mxu0 0
  %59 = vmatpush1.bf16.msra.mxu0 0
  %60 = vmatprep.subr.bf16.mxu0 0
  %61 = vmatpush1.bf16.msra.mxu0 0
  %62 = vmatprep.subr.bf16.mxu0 0
  %63 = vmatpush1.bf16.msra.mxu0 0
  %64 = vmatprep.subr.bf16.mxu0 0
  %65 = vmatpush1.bf16.msra.mxu0 0
  %66 = vmatprep.subr.bf16.mxu0 0
  %67 = vmatpush1.bf16.msra.mxu0 0
  %68 = vmatprep.subr.bf16.mxu0 0
  %69 = vmatpush1.bf16.msra.mxu0 0
  %70 = vmatprep.subr.bf16.mxu0 %v49
  %71 = vmatpush1.bf16.msra.mxu0 %v48
  %72 = vmatprep.subr.bf16.mxu0 %v47
  %73 = vmatpush1.bf16.msra.mxu0 %v46
  %74 = vmatprep.subr.bf16.mxu0 0
  %75 = vmatpush2.bf16.msra.mxu0 0
  %76 = vmatprep.subr.bf16.mxu0 0
  %77 = vmatpush2.bf16.msra.mxu0 0
  %78 = vmatprep.subr.bf16.mxu0 0
  %79 = vmatpush2.bf16.msra.mxu0 0
  %80 = vmatprep.subr.bf16.mxu0 0
  %81 = vmatpush2.bf16.msra.mxu0 0
  %82 = vmatprep.subr.bf16.mxu0 0
  %83 = vmatpush2.bf16.msra.mxu0 0
  %84 = vmatprep.subr.bf16.mxu0 0
  %85 = vmatpush2.bf16.msra.mxu0 0
  %86 = vmatprep.subr.bf16.mxu0 0
  %87 = vmatpush2.bf16.msra.mxu0 0
  %88 = vmatprep.subr.bf16.mxu0 0
  %89 = vmatpush2.bf16.msra.mxu0 0
  %90 = vmatprep.mubr.bf16.mxu0 0
  %91 = vmatmul.mubr.bf16.gmra.mxu0 %v56
  %v92 = vpop.f32.mrf.mxu0
  %v93 = vadd.f32 %v27, %v92
  %v94 = vpop.f32.mrf.mxu0
  %v95 = vadd.f32 %v31, %v94
  %v96 = vpop.f32.mrf.mxu0
  %v97 = vadd.f32 %v27, %v96
  %v98 = vpop.f32.mrf.mxu0
  %v99 = vadd.f32 %v31, %v98
  %100 = vdwg.mxu0
  %101 = vmax.xlane.f32.xlu0 %v93
  %v102 = vpop.xlane.xlu0 %101
  %103 = vmax.xlane.f32.xlu0 %v97
  %v104 = vpop.xlane.xlu0 %103
  %v105 = vsub.f32 %v93, %v102
  %v106 = vsub.f32 %v97, %v104
  %v107 = vmul.f32 %v105, 1.442695
  %v108 = vpow.pop %v107
  %v109 = vmul.f32 %v106, 1.442695
  %v110 = vpow.pop %v109
  %111 = vadd.xlane.f32.xlu0 %v108
  %v112 = vpop.xlane.xlu0 %111
  %113 = vadd.xlane.f32.xlu0 %v110
  %v114 = vpop.xlane.xlu0 %113
  %v115 = vlog2.pop %v112
  %v116 = vmul.f32 %v115, 0.6931472
  %v117 = vlog2.pop %v114
  %v118 = vmul.f32 %v117, 0.6931472
  %v119 = vsub.f32 %v95, %v102
  %v120 = vsub.f32 %v99, %v104
  %v121 = vsub.f32 %v119, %v116
  %v122 = vsub.f32 %v120, %v118
  %123 = vst [vmem:[%s3] sm:$0xff] %v121
  %124 = vst [vmem:[%s3 + $0x8] sm:$0xff] %v122
  // Predicated region
  $region14: #{_aligner_device.2} parent=0 // pred_check
    _
  $region15: #{_aligner_device.2} parent=0 // pred_check_branch
    %126 = sbr.rel (0) target = $region17
  $region16: #{_aligner_device.2} parent=0 // pred_region
    _
  $region17: #{_aligner_device.2} parent=0 // pred_fallthru
    _
  // Predicated region
  $region18: #{_aligner_device.2} parent=0 // pred_check
    _
  $region19: #{_aligner_device.2} parent=0 // pred_check_branch
    %128 = sbr.rel (0) target = $region21
  $region20: #{_aligner_device.2} parent=0 // pred_region
    _
  $region21: #{_aligner_device.2} parent=0 // pred_fallthru
    _

// kernel: _aligner_device.3
$region0: #{_aligner_device.3}
  #allocation0 [shape = 'u32[]', space=smem, size = 0x4, offset = 0x4, fixed_abs, tag = 'smem constant byte address 0x4 - core index']
  #allocation1 [shape = 'u32[144,128]{1,0:T(1,128)}', space=vmem, size = 0x12000, scoped, tag = 'internal scratch']
  #allocation2 [shape = 'f32[1,128]{1,0:T(1,128)}', space=vmem, size = 0x200, scoped, tag = 'scratch operand']
  %s0 = inlined_call_operand.vmem [shape: f32[24], index: 0, kind: input, shape index: {}]
  %s1 = inlined_call_operand.vmem [shape: f32[24], index: 1, kind: input, shape index: {}]
  %s2 = inlined_call_operand.vmem [shape: f32[16,128], index: 2, kind: input, shape index: {}]
  %s3 = inlined_call_operand.hbm [shape: f32[16,128], index: 3, kind: output, shape index: {}]
  %s4 = sld [smem:[#allocation0]]
  $region41: #{_aligner_device.3} parent=0
    _
  %s6 = ssub.s32 1, %s4
  %s7 = scalar_select 0, %s6, %s4
  $region1: #{_aligner_device.3} parent=0
    #allocation3 [shape = 'u8[512]{0}', space=smem, size = 0x200, scoped, tag = 'input window, operand 0, single buffered']
    #allocation4 [shape = 's32[1]{0}', space=sflag, size = 0x4, scoped, tag = 'scoped memory for _aligner_device.3']
    #allocation5 [shape = 's32[1]{0}', space=sflag, size = 0x4, scoped, tag = 'scoped memory for _aligner_device.3']
    #allocation6 [shape = 'u8[512]{0}', space=smem, size = 0x200, scoped, tag = 'input window, operand 1, single buffered']
    #allocation7 [shape = 's32[1]{0}', space=sflag, size = 0x4, scoped, tag = 'scoped memory for _aligner_device.3']
    #allocation8 [shape = 'u8[8192]{0}', space=vmem, size = 0x2000, scoped, tag = 'output window, operand 0, single buffered']
    %8 = vsyncpa [#allocation5], 0
    %9 = vsyncpa [#allocation7], 0
    %10 = vsyncpa [#allocation4], 0
    // Predicated region
    $region2: #{_aligner_device.3} parent=1 // pred_check
      _
    $region3: #{_aligner_device.3} parent=1 // pred_check_branch
      %12 = sbr.rel (0) target = $region5
    $region4: #{_aligner_device.3} parent=1 // pred_region
      %s14 = ssub.s32 16, 16
      %15 = vsyncadd [#allocation5], %s14
      %s17 = sshll.u32 %s0, 4
      %s18 = int_to_ptr.vmem [resolvable:$true] %s17
      %20 = dma.vmem_to_smem %s18, 16, [#allocation3], [#allocation5]
    $region5: #{_aligner_device.3} parent=1 // pred_fallthru
      _
    // Predicated region
    $region6: #{_aligner_device.3} parent=1 // pred_check
      _
    $region7: #{_aligner_device.3} parent=1 // pred_check_branch
      %22 = sbr.rel (0) target = $region9
    $region8: #{_aligner_device.3} parent=1 // pred_region
      %s24 = ssub.s32 16, 16
      %25 = vsyncadd [#allocation7], %s24
      %s27 = sshll.u32 %s1, 4
      %s28 = int_to_ptr.vmem [resolvable:$true] %s27
      %30 = dma.vmem_to_smem %s28, 16, [#allocation6], [#allocation7]
    $region9: #{_aligner_device.3} parent=1 // pred_fallthru
      _
    // Predicated region
    $region10: #{_aligner_device.3} parent=1 // pred_check
      _
    $region11: #{_aligner_device.3} parent=1 // pred_check_branch
      %32 = sbr.rel (0) target = $region13
    $region12: #{_aligner_device.3} parent=1 // pred_region
      _
    $region13: #{_aligner_device.3} parent=1 // pred_fallthru
      _
    // Predicated region
    $region14: #{_aligner_device.3} parent=1 // pred_check
      _
    $region15: #{_aligner_device.3} parent=1 // pred_check_branch
      %34 = sbr.rel (0) target = $region17
    $region16: #{_aligner_device.3} parent=1 // pred_region
      %35 = dma.done [#allocation5], 16
    $region17: #{_aligner_device.3} parent=1 // pred_fallthru
      _
    // Predicated region
    $region18: #{_aligner_device.3} parent=1 // pred_check
      _
    $region19: #{_aligner_device.3} parent=1 // pred_check_branch
      %37 = sbr.rel (0) target = $region21
    $region20: #{_aligner_device.3} parent=1 // pred_region
      %38 = dma.done [#allocation7], 16
    $region21: #{_aligner_device.3} parent=1 // pred_fallthru
      _
    %39 = sfence
    %s40 = smul.u32 0, 16
    %v41 = vlaneseq
    %v42 = vand.u32 %v41, 127
    %vm43 = vcmp.eq.s32.totalorder %v42, 0
    %vm44 = vcmp.eq.s32.totalorder %v42, 1
    %p45 = scmp.eq.s32.totalorder 0, 0
    // Predicated region
    $region22: #{_aligner_device.3} parent=1 // pred_check
      %p46 = pneg %p45
    $region23: #{_aligner_device.3} parent=1 // pred_check_branch
      %48 = sbr.rel (%p46) target = $region25
    $region24: #{_aligner_device.3} parent=1 // pred_region
      %s49 = sld [smem:[#allocation6]]
      %v50 = vstv %s49
      %v51 = vsel %vm43, %v50, -inf
      %52 = vst [vmem:[#allocation2] sm:$0x1] %v51
    $region25: #{_aligner_device.3} parent=1 // pred_fallthru
      _
    %v53 = vld [vmem:[#allocation2] sm:$0x1]
    loop: start=0, step=1, limit=2
    $region26: #{_aligner_device.3} parent=1 // loop_pre_header
      _
    $region27: #{_aligner_device.3} parent=1 // loop_header
      %s55 = sphi 0, %s59
      %p56 = scmp.ge.s32.totalorder %s55, 2
      %v60 = vphi %v53, %v191
    $region28: #{_aligner_device.3} parent=1 // loop_header_branch
      %58 = sbr.rel (%p56) target = $region32
    $region29: #{_aligner_device.3} parent=1 // loop_body
      %s61 = smul.u32 %s55, 8
      %s62 = scalar_lea.vmem %s2, %s61
      %v63 = vld [vmem:[%s62] sm:$0xff]
      %s64 = sadd.s32 %s40, %s61
      %s65 = sld [smem:[#allocation3 + %s64]]
      %s66 = sadd.s32 %s64, 1
      %s67 = sld [smem:[#allocation3 + %s66]]
      %s68 = sld [smem:[#allocation6 + %s66]]
      %s69 = sadd.s32 %s64, 2
      %s70 = sld [smem:[#allocation6 + %s69]]
      %71 = vrot.lane.b32.xlu0 %v60, 1
      %v72 = vpop.permute.xlu0 %71
      %73 = vrot.lane.b32.xlu0 %v60, 2
      %v74 = vpop.permute.xlu0 %73
      %75 = vrot.lane.b32.xlu0 %v63, 1
      %v76 = vpop.permute.xlu0 %75
      %v77 = vstv %s65
      %v78 = vadd.f32 %v60, %v77
      %v79 = vadd.f32 %v72, %v63
      %v80 = vmax.f32 %v78, %v79
      %v81 = vstv %s68
      %v82 = vsel %vm43, %v81, %v80
      %v83 = vadd.f32 %v72, %v77
      %v84 = vadd.f32 %v74, %v76
      %v85 = vmax.f32 %v83, %v84
      %v86 = vsel %vm44, %v81, %v85
      %v87 = vstv %s67
      %v88 = vadd.f32 %v82, %v87
      %v90 = vrot.slane %v63, 1
      %v92 = vadd.f32 %v86, %v90
      %v93 = vmax.f32 %v88, %v92
      %v94 = vstv %s70
      %v95 = vsel %vm43, %v94, %v93
      %s96 = sld [smem:[#allocation3 + %s69]]
      %s97 = sadd.s32 %s64, 3
      %s98 = sld [smem:[#allocation3 + %s97]]
      %s99 = sld [smem:[#allocation6 + %s97]]
      %s100 = sadd.s32 %s64, 4
      %s101 = sld [smem:[#allocation6 + %s100]]
      %102 = vrot.lane.b32.xlu0 %v95, 1
      %v103 = vpop.permute.xlu0 %102
      %104 = vrot.lane.b32.xlu0 %v95, 2
      %v105 = vpop.permute.xlu0 %104
      %v106 = vrot.slane %v63, 2
      %108 = vrot.lane.b32.xlu0 %v106, 1
      %v109 = vpop.permute.xlu0 %108
      %v110 = vstv %s96
      %v111 = vadd.f32 %v95, %v110
      %v112 = vadd.f32 %v103, %v106
      %v113 = vmax.f32 %v111, %v112
      %v114 = vstv %s99
      %v115 = vsel %vm43, %v114, %v113
      %v116 = vadd.f32 %v103, %v110
      %v117 = vadd.f32 %v105, %v109
      %v118 = vmax.f32 %v116, %v117
      %v119 = vsel %vm44, %v114, %v118
      %v120 = vstv %s98
      %v121 = vadd.f32 %v115, %v120
      %v122 = vrot.slane %v63, 3
      %v124 = vadd.f32 %v119, %v122
      %v125 = vmax.f32 %v121, %v124
      %v126 = vstv %s101
      %v127 = vsel %vm43, %v126, %v125
      %s128 = sld [smem:[#allocation3 + %s100]]
      %s129 = sadd.s32 %s64, 5
      %s130 = sld [smem:[#allocation3 + %s129]]
      %s131 = sld [smem:[#allocation6 + %s129]]
      %s132 = sadd.s32 %s64, 6
      %s133 = sld [smem:[#allocation6 + %s132]]
      %134 = vrot.lane.b32.xlu0 %v127, 1
      %v135 = vpop.permute.xlu0 %134
      %136 = vrot.lane.b32.xlu0 %v127, 2
      %v137 = vpop.permute.xlu0 %136
      %v138 = vrot.slane %v63, 4
      %140 = vrot.lane.b32.xlu0 %v138, 1
      %v141 = vpop.permute.xlu0 %140
      %v142 = vstv %s128
      %v143 = vadd.f32 %v127, %v142
      %v144 = vadd.f32 %v135, %v138
      %v145 = vmax.f32 %v143, %v144
      %v146 = vstv %s131
      %v147 = vsel %vm43, %v146, %v145
      %v148 = vadd.f32 %v135, %v142
      %v149 = vadd.f32 %v137, %v141
      %v150 = vmax.f32 %v148, %v149
      %v151 = vsel %vm44, %v146, %v150
      %v152 = vstv %s130
      %v153 = vadd.f32 %v147, %v152
      %v154 = vrot.slane %v63, 5
      %v156 = vadd.f32 %v151, %v154
      %v157 = vmax.f32 %v153, %v156
      %v158 = vstv %s133
      %v159 = vsel %vm43, %v158, %v157
      %s160 = sld [smem:[#allocation3 + %s132]]
      %s161 = sadd.s32 %s64, 7
      %s162 = sld [smem:[#allocation3 + %s161]]
      %s163 = sld [smem:[#allocation6 + %s161]]
      %s164 = sadd.s32 %s64, 8
      %s165 = sld [smem:[#allocation6 + %s164]]
      %166 = vrot.lane.b32.xlu0 %v159, 1
      %v167 = vpop.permute.xlu0 %166
      %168 = vrot.lane.b32.xlu0 %v159, 2
      %v169 = vpop.permute.xlu0 %168
      %v170 = vrot.slane %v63, 6
      %172 = vrot.lane.b32.xlu0 %v170, 1
      %v173 = vpop.permute.xlu0 %172
      %v174 = vstv %s160
      %v175 = vadd.f32 %v159, %v174
      %v176 = vadd.f32 %v167, %v170
      %v177 = vmax.f32 %v175, %v176
      %v178 = vstv %s163
      %v179 = vsel %vm43, %v178, %v177
      %v180 = vadd.f32 %v167, %v174
      %v181 = vadd.f32 %v169, %v173
      %v182 = vmax.f32 %v180, %v181
      %v183 = vsel %vm44, %v178, %v182
      %v184 = vstv %s162
      %v185 = vadd.f32 %v179, %v184
      %v186 = vrot.slane %v63, 7
      %v188 = vadd.f32 %v183, %v186
      %v189 = vmax.f32 %v185, %v188
      %v190 = vstv %s165
      %v191 = vsel %vm43, %v190, %v189
      %v193 = vrot.slane %v95, 7
      %v196 = vrot.slane %v115, 6
      %v199 = vrot.slane %v127, 5
      %v202 = vrot.slane %v147, 4
      %v205 = vrot.slane %v159, 3
      %v208 = vrot.slane %v179, 2
      %v211 = vrot.slane %v191, 1
      %vm213 = vcmask 1040384
      %v214 = vsel %vm213, %v82, %v193
      %vm215 = vcmask 1041408
      %v216 = vsel %vm215, %v214, %v196
      %vm217 = vcmask 1042432
      %v218 = vsel %vm217, %v216, %v199
      %vm219 = vcmask 1043456
      %v220 = vsel %vm219, %v218, %v202
      %vm221 = vcmask 1044480
      %v222 = vsel %vm221, %v220, %v205
      %vm223 = vcmask 1045504
      %v224 = vsel %vm223, %v222, %v208
      %vm225 = vcmask 1046528
      %v226 = vsel %vm225, %v224, %v211
      %s227 = scalar_lea.vmem [#allocation8], %s61
      %228 = vst [vmem:[%s227] sm:$0xff] %v226
    $region30: #{_aligner_device.3} parent=1 // loop_footer
      %s59 = sadd.s32 1, %s55
    $region31: #{_aligner_device.3} parent=1 // loop_footer_branch
      %54 = sbr.rel target = $region27
    $region32: #{_aligner_device.3} parent=1 // loop_exit
      _
    %229 = vst [vmem:[#allocation2] sm:$0x1] %v60
    // Predicated region
    $region33: #{_aligner_device.3} parent=1 // pred_check
      _
    $region34: #{_aligner_device.3} parent=1 // pred_check_branch
      %231 = sbr.rel (0) target = $region36
    $region35: #{_aligner_device.3} parent=1 // pred_region
      %s233 = ssub.s32 256, 256
      %234 = vsyncadd [#allocation4], %s233
      %s235 = sshll.u32 [#allocation8], 4
      %s236 = int_to_ptr.vmem [resolvable:$true] %s235
      %241 = dma.vmem_to_hbm [thread:$0]  %s236, 256, %s3, [#allocation4], 128, 128, 8
    $region36: #{_aligner_device.3} parent=1 // pred_fallthru
      _
    // Predicated region
    $region37: #{_aligner_device.3} parent=1 // pred_check
      _
    $region38: #{_aligner_device.3} parent=1 // pred_check_branch
      %243 = sbr.rel (0) target = $region40
    $region39: #{_aligner_device.3} parent=1 // pred_region
      %244 = dma.done [#allocation4], 256
    $region40: #{_aligner_device.3} parent=1 // pred_fallthru
      _
    %245 = vsyncpa [#allocation4], 1
    %246 = vsyncpa [#allocation5], 1
    %247 = vsyncpa [#allocation7], 1

</llo_original>
